<compile_context>
chip_gen: v5e
topology: v5e:2x2
jax: 0.10.0
libtpu: 0.0.40
codegen_flags: <defaults>
</compile_context>

<pallas_src>
import jax
import jax.numpy as jnp
from jax.experimental import pallas as pl
from jax.experimental.pallas import tpu as pltpu


def _encoder_kernel(first_ref, second_ref, w_ref, out_ref):
    # first_ref:  (1, S, R)  frame rows [0, S)  (half-window t),   time on lanes
    # second_ref: (1, S, R)  frame rows [S, L)  (half-window t+1), time on lanes
    # w_ref:      (N, L)     conv weight, resident across the whole grid
    # out_ref:    (1, N, R)  transposed output block (lane-dense stores, R multiple of 128)
    frames_t = jnp.concatenate([first_ref[0], second_ref[0]], axis=0)     # (L, R) sublane concat
    # (N, L) x (L, R) contracted on L: lhs K on lanes, rhs K on sublanes -> MXU-native.
    y = jax.lax.dot_general(
        w_ref[...], frames_t,
        dimension_numbers=(((1,), (0,)), ((), ())),
        preferred_element_type=jnp.float32)                               # (N, R)
    out_ref[0] = jnp.maximum(y, 0.0).astype(out_ref.dtype)                # ReLU on the VPU


def _pick_row_tile(t_out: int, batch: int) -> int:
    """Output time-steps handled per grid step (lane width of one block)."""
    # Prefer big lane-dense tiles (amortize ~0.35us/step fixed overhead, wide unmasked vst)
    # but keep >= 2 total grid steps when possible so v7x's two TensorCores both get work.
    for r in (2048, 1024, 512, 256, 128):
        if r <= t_out and t_out % r == 0 and batch * (t_out // r) >= 2:
            return r
    for r in (2048, 1024, 512, 256, 128):
        if r <= t_out and t_out % r == 0:
            return r
    if t_out <= 2048:
        return t_out                 # single full-extent (possibly non-128-multiple) tile
    return 512                       # cdiv grid; partial last block handled by masked stores


def encoder_forward(x, weight, L, row_tile=None):
    """x: (B, 1, T) float32; weight: (N, 1, L) (PyTorch Conv1d layout, bias-free).
    Returns ReLU(Conv1d(x, stride=L//2, bias=False)): (B, N, T_out)."""
    B, C, T = x.shape
    assert C == 1, "Encoder expects a single input channel"
    # TODO(synk): odd L (stride != L/2 exactly) would need a generic framing path; SepFormer uses even L.
    assert L % 2 == 0, "half-window framing requires an even kernel size"
    N = weight.shape[0]
    S = L // 2                                            # stride == half-window size
    T_out = (T - L) // S + 1
    H = T_out + 1                                         # number of half-windows used

    R = row_tile if row_tile is not None else _pick_row_tile(T_out, B)
    J = pl.cdiv(T_out, R)

    # Lane-dense re-layout: time index on the minor (lane) axis, S=L//2 on sublanes.
    halvesT = x[:, 0, : H * S].reshape(B, H, S).swapaxes(1, 2)            # (B, S, H)
    first = halvesT[:, :, :T_out]                                         # (B, S, T_out)
    second = halvesT[:, :, 1:H]                                           # (B, S, T_out)
    w2d = weight.reshape(N, L)                                            # (N, L)

    cost = pl.CostEstimate(
        flops=2 * B * N * T_out * L,
        transcendentals=0,
        bytes_accessed=(B * N * T_out + 2 * B * S * T_out + N * L) * 4)

    out = pl.pallas_call(
        _encoder_kernel,
        out_shape=jax.ShapeDtypeStruct((B, N, T_out), x.dtype),
        grid_spec=pltpu.PrefetchScalarGridSpec(
            num_scalar_prefetch=0,
            grid=(B, J),
            in_specs=[
                pl.BlockSpec((1, S, R), lambda b, j: (b, 0, j)),          # first halves
                pl.BlockSpec((1, S, R), lambda b, j: (b, 0, j)),          # second halves (+1 shift)
                pl.BlockSpec((N, L), lambda b, j: (0, 0)),                # resident weight
            ],
            out_specs=pl.BlockSpec((1, N, R), lambda b, j: (b, 0, j)),
        ),
        compiler_params=pltpu.CompilerParams(
            dimension_semantics=("parallel", "parallel")),
        cost_estimate=cost,
    )(first, second, w2d)                                                 # (B, N, T_out)
    return out


if __name__ == "__main__":
    key = jax.random.PRNGKey(0)
    kx, kw, kx2 = jax.random.split(key, 3)

    L, N = 16, 64                       # audio encoder: kernel 16, stride 8, 64 filters
    S = L // 2

    # Deterministic synthetic conv weight (shape as in nn.Conv1d(1, N, L, bias=False)).
    weight = jax.random.normal(kw, (N, 1, L), dtype=jnp.float32) * (1.0 / L) ** 0.5

    # --- test 1: exactly divisible time axis (B=2 -> >= 2 parallel grid steps) ---
    B, T_out = 2, 1024
    T = (T_out + 1) * S                                   # 8200 samples
    x = jax.random.normal(kx, (B, 1, T), dtype=jnp.float32)

    y = jax.block_until_ready(encoder_forward(x, weight, L))
    ref = jnp.maximum(jax.lax.conv_general_dilated(
        x, weight, window_strides=(S,), padding="VALID",
        dimension_numbers=("NCH", "OIH", "NCH")), 0.0)
    assert y.shape == ref.shape == (B, N, T_out), (y.shape, ref.shape)
    assert jnp.allclose(y, ref, atol=1e-5, rtol=1e-5), float(jnp.max(jnp.abs(y - ref)))

    # --- test 2: T_out not divisible by the row tile (exercises masked partial blocks) ---
    B2, T_out2 = 1, 300
    T2 = (T_out2 + 1) * S
    x2 = jax.random.normal(kx2, (B2, 1, T2), dtype=jnp.float32)

    y2 = jax.block_until_ready(encoder_forward(x2, weight, L, row_tile=128))
    ref2 = jnp.maximum(jax.lax.conv_general_dilated(
        x2, weight, window_strides=(S,), padding="VALID",
        dimension_numbers=("NCH", "OIH", "NCH")), 0.0)
    assert y2.shape == ref2.shape == (B2, N, T_out2), (y2.shape, ref2.shape)
    assert jnp.allclose(y2, ref2, atol=1e-5, rtol=1e-5), float(jnp.max(jnp.abs(y2 - ref2)))

    print("KERNEL_OK")
</pallas_src>

<mosaic_0001>
module attributes {stable_mosaic.version = 11 : i64} {
  func.func @_encoder_kernel(%arg0: i32, %arg1: i32, %arg2: memref<1x8x1024xf32, #tpu.memory_space<vmem>>, %arg3: memref<1x8x1024xf32, #tpu.memory_space<vmem>>, %arg4: memref<64x16xf32, #tpu.memory_space<vmem>>, %arg5: memref<1x64x1024xf32, #tpu.memory_space<vmem>>) attributes {dimension_semantics = [#tpu.dimension_semantics<parallel>, #tpu.dimension_semantics<parallel>], iteration_bounds = array<i64: 2, 1>, scalar_prefetch = 0 : i64, scratch_operands = 0 : i64, tpu.core_type = #tpu.core_type<tc>, window_params = [{transform_indices = @transform_0, window_bounds = array<i64: 1, 8, 1024>}, {transform_indices = @transform_1, window_bounds = array<i64: 1, 8, 1024>}, {pipeline_mode = #tpu.pipeline_mode<synchronous>, transform_indices = @transform_2, window_bounds = array<i64: 64, 16>}, {transform_indices = @transform_3, window_bounds = array<i64: 1, 64, 1024>}]} {
    %c0 = arith.constant 0 : index
    %c0_0 = arith.constant 0 : index
    %c0_1 = arith.constant 0 : index
    %0 = vector.load %arg2[%c0, %c0_0, %c0_1] : memref<1x8x1024xf32, #tpu.memory_space<vmem>>, vector<1x8x1024xf32>
    %1 = vector.shape_cast %0 : vector<1x8x1024xf32> to vector<8x1024xf32>
    %c0_2 = arith.constant 0 : index
    %c0_3 = arith.constant 0 : index
    %c0_4 = arith.constant 0 : index
    %2 = vector.load %arg3[%c0_2, %c0_3, %c0_4] : memref<1x8x1024xf32, #tpu.memory_space<vmem>>, vector<1x8x1024xf32>
    %3 = vector.shape_cast %2 : vector<1x8x1024xf32> to vector<8x1024xf32>
    %4 = tpu.concatenate %1, %3 in 0 : vector<8x1024xf32>, vector<8x1024xf32> -> vector<16x1024xf32>
    %c0_5 = arith.constant 0 : index
    %c0_6 = arith.constant 0 : index
    %5 = vector.load %arg4[%c0_5, %c0_6] : memref<64x16xf32, #tpu.memory_space<vmem>>, vector<64x16xf32>
    %cst = arith.constant dense<0.000000e+00> : vector<64x1024xf32>
    %6 = tpu.matmul %5, %4, %cst {dimension_numbers = #tpu.dot_dimension_numbers<[1], [0], [0], [1], [0, 0, 1, 1], [], []>} : vector<64x16xf32>, vector<16x1024xf32>, vector<64x1024xf32> -> vector<64x1024xf32>
    %cst_7 = arith.constant 0.000000e+00 : f32
    %7 = vector.broadcast %cst_7 : f32 to vector<64x1024xf32>
    %8 = arith.maximumf %6, %7 : vector<64x1024xf32>
    %c0_8 = arith.constant 0 : index
    %c0_9 = arith.constant 0 : index
    %c0_10 = arith.constant 0 : index
    %9 = vector.load %arg5[%c0_8, %c0_9, %c0_10] : memref<1x64x1024xf32, #tpu.memory_space<vmem>>, vector<1x64x1024xf32>
    %10 = vector.shape_cast %9 : vector<1x64x1024xf32> to vector<64x1024xf32>
    %11 = vector.shape_cast %8 : vector<64x1024xf32> to vector<1x64x1024xf32>
    tpu.vector_store %arg5[%c0_8, %c0_9, %c0_10], %11 {strides = array<i32>} : memref<1x64x1024xf32, #tpu.memory_space<vmem>>, vector<1x64x1024xf32>,
    return
  }
  func.func @transform_0(%arg0: i32, %arg1: i32) -> (i32, i32, i32) {
    %c0_i32 = arith.constant 0 : i32
    %c0_i32_0 = arith.constant 0 : i32
    return %arg0, %c0_i32, %arg1 : i32, i32, i32
  }
  func.func @transform_1(%arg0: i32, %arg1: i32) -> (i32, i32, i32) {
    %c0_i32 = arith.constant 0 : i32
    %c0_i32_0 = arith.constant 0 : i32
    return %arg0, %c0_i32, %arg1 : i32, i32, i32
  }
  func.func @transform_2(%arg0: i32, %arg1: i32) -> (i32, i32) {
    %c0_i32 = arith.constant 0 : i32
    %c0_i32_0 = arith.constant 0 : i32
    %c0_i32_1 = arith.constant 0 : i32
    return %c0_i32, %c0_i32_0 : i32, i32
  }
  func.func @transform_3(%arg0: i32, %arg1: i32) -> (i32, i32, i32) {
    %c0_i32 = arith.constant 0 : i32
    %c0_i32_0 = arith.constant 0 : i32
    return %arg0, %c0_i32, %arg1 : i32, i32, i32
  }
}

</mosaic_0001>

<llo_original>
// kernel: tpu_custom_call.1
$region0: #{tpu_custom_call.1}
  #allocation0 [shape = 'u32[]', space=smem, size = 0x4, offset = 0x4, fixed_abs, tag = 'smem constant byte address 0x4 - core index']
  #allocation1 [shape = 'u32[72,128]{1,0:T(1,128)}', space=vmem, size = 0x9000, scoped, tag = 'internal scratch']
  %s0 = inlined_call_operand.hbm [shape: f32[2,8,1024], index: 0, kind: input, shape index: {}]
  %s1 = inlined_call_operand.hbm [shape: f32[2,8,1024], index: 1, kind: input, shape index: {}]
  %s2 = inlined_call_operand.vmem [shape: f32[64,16], index: 2, kind: input, shape index: {}]
  %s3 = inlined_call_operand.hbm [shape: f32[2,64,1024], index: 3, kind: output, shape index: {}]
  %s4 = sld [smem:[#allocation0]]
  $region53: #{tpu_custom_call.1} parent=0
    _
  %s6 = ssub.s32 1, %s4
  %s7 = scalar_select 0, %s6, %s4
  $region1: #{tpu_custom_call.1} parent=0
    #allocation2 [shape = 'u8[65536]{0}', space=vmem, size = 0x10000, scoped, tag = 'input window, operand 0']
    #allocation3 [shape = 's32[2]{0}', space=sflag, size = 0x8, scoped, tag = 'scoped memory for tpu_custom_call.1']
    #allocation4 [shape = 's32[2]{0}', space=sflag, size = 0x8, scoped, tag = 'scoped memory for tpu_custom_call.1']
    #allocation5 [shape = 'u8[65536]{0}', space=vmem, size = 0x10000, scoped, tag = 'input window, operand 1']
    #allocation6 [shape = 's32[2]{0}', space=sflag, size = 0x8, scoped, tag = 'scoped memory for tpu_custom_call.1']
    #allocation7 [shape = 'u8[524288]{0}', space=vmem, size = 0x80000, scoped, tag = 'output window, operand 0']
    %8 = vsyncpa [#allocation3], 0
    %s9 = scalar_lea.sflag [#allocation3], 1
    %10 = vsyncpa %s9, 0
    %11 = vsyncpa [#allocation6], 0
    %s12 = scalar_lea.sflag [#allocation6], 1
    %13 = vsyncpa %s12, 0
    %14 = vsyncpa [#allocation4], 0
    %s15 = scalar_lea.sflag [#allocation4], 1
    %16 = vsyncpa %s15, 0
    loop: start=0, step=1, limit=4
    $region2: #{tpu_custom_call.1} parent=1 // loop_pre_header
      _
    $region3: #{tpu_custom_call.1} parent=1 // loop_header
      %s18 = sphi 0, %s22
      %p19 = scmp.ge.s32.totalorder %s18, 4
      %s25 = sphi 0, %s37
      %s26 = sphi 0, %s33
      %s27 = sphi 0, %s25
      %s28 = sphi 0, %s26
      %s29 = sphi 0, %s27
      %s30 = sphi 0, %s28
      %s42 = sphi 0, %s44
      %s45 = sphi 0, %s42
      %s46 = sphi 0, %s45
      %s62 = sphi 0, %s46
      %s70 = sphi 0, %s72
      %s73 = sphi 0, %s70
      %s74 = sphi 0, %s73
      %s90 = sphi 0, %s74
      %s94 = sphi 0, %s94
      %s96 = sphi 0, %s94
      %s97 = sphi 0, %s96
      %s111 = sphi 0, %s97
      %s119 = sphi 0, %s121
      %s122 = sphi 0, %s119
      %s123 = sphi 0, %s122
      %s139 = sphi 0, %s123
    $region4: #{tpu_custom_call.1} parent=1 // loop_header_branch
      %21 = sbr.rel (%p19) target = $region8
    $region5: #{tpu_custom_call.1} parent=1 // loop_body
      %s23 = ssub.s32 %s18, 1
      %s24 = ssub.s32 %s18, 2
      %s31 = sadd.s32 1, %s26
      %p32 = scmp.ge.s32.totalorder %s31, 1
      %s33 = scalar_select %p32, 0, %s31
      %s34 = sadd.s32 1, %s25
      %s35 = scalar_select %p32, %s34, %s25
      %p36 = scmp.ge.s32.totalorder %s35, 2
      %s37 = scalar_select %p36, 0, %s35
      %s38 = ssub.s32 %s25, %s37
      %s39 = ssub.s32 %s26, %s33
      %s40 = sor.u32 %s38, %s39
      %p41 = scmp.eq.s32.totalorder %s40, 0
      %s43 = sadd.s32 %s42, 1
      %s44 = scalar_select %p41, %s42, %s43
      %p47 = pneg %p41
      %p48 = scmp.eq.s32.totalorder %s18, 1
      %p49 = por %p47, %p48
      %p50 = scmp.ne.s32.totalorder %s42, %s45
      %p51 = scmp.eq.s32.totalorder %s18, 0
      %p52 = por %p50, %p51
      %p53 = scmp.ne.s32.totalorder %s42, %s45
      %p54 = scmp.eq.s32.totalorder %s23, 1
      %p55 = por %p53, %p54
      %p56 = scmp.ne.s32.totalorder %s45, %s46
      %p57 = scmp.eq.s32.totalorder %s23, 0
      %p58 = por %p56, %p57
      %p59 = scmp.ne.s32.totalorder %s45, %s46
      %p60 = scmp.eq.s32.totalorder %s24, 1
      %p61 = por %p59, %p60
      %p63 = scmp.ne.s32.totalorder %s46, %s62
      %p64 = scmp.eq.s32.totalorder %s24, 0
      %p65 = por %p63, %p64
      %s66 = ssub.s32 %s25, %s37
      %s67 = ssub.s32 %s26, %s33
      %s68 = sor.u32 %s66, %s67
      %p69 = scmp.eq.s32.totalorder %s68, 0
      %s71 = sadd.s32 %s70, 1
      %s72 = scalar_select %p69, %s70, %s71
      %p75 = pneg %p69
      %p76 = scmp.eq.s32.totalorder %s18, 1
      %p77 = por %p75, %p76
      %p78 = scmp.ne.s32.totalorder %s70, %s73
      %p79 = scmp.eq.s32.totalorder %s18, 0
      %p80 = por %p78, %p79
      %p81 = scmp.ne.s32.totalorder %s70, %s73
      %p82 = scmp.eq.s32.totalorder %s23, 1
      %p83 = por %p81, %p82
      %p84 = scmp.ne.s32.totalorder %s73, %s74
      %p85 = scmp.eq.s32.totalorder %s23, 0
      %p86 = por %p84, %p85
      %p87 = scmp.ne.s32.totalorder %s73, %s74
      %p88 = scmp.eq.s32.totalorder %s24, 1
      %p89 = por %p87, %p88
      %p91 = scmp.ne.s32.totalorder %s74, %s90
      %p92 = scmp.eq.s32.totalorder %s24, 0
      %p93 = por %p91, %p92
      %s95 = sadd.s32 %s94, 1
      %p98 = scmp.eq.s32.totalorder %s18, 1
      %p99 = scmp.ne.s32.totalorder %s94, %s96
      %p100 = scmp.eq.s32.totalorder %s18, 0
      %p101 = por %p99, %p100
      %p102 = scmp.ne.s32.totalorder %s94, %s96
      %p103 = scmp.eq.s32.totalorder %s23, 1
      %p104 = por %p102, %p103
      %p105 = scmp.ne.s32.totalorder %s96, %s97
      %p106 = scmp.eq.s32.totalorder %s23, 0
      %p107 = por %p105, %p106
      %p108 = scmp.ne.s32.totalorder %s96, %s97
      %p109 = scmp.eq.s32.totalorder %s24, 1
      %p110 = por %p108, %p109
      %p112 = scmp.ne.s32.totalorder %s97, %s111
      %p113 = scmp.eq.s32.totalorder %s24, 0
      %p114 = por %p112, %p113
      %s115 = ssub.s32 %s25, %s37
      %s116 = ssub.s32 %s26, %s33
      %s117 = sor.u32 %s115, %s116
      %p118 = scmp.eq.s32.totalorder %s117, 0
      %s120 = sadd.s32 %s119, 1
      %s121 = scalar_select %p118, %s119, %s120
      %p124 = pneg %p118
      %p125 = scmp.eq.s32.totalorder %s18, 1
      %p126 = por %p124, %p125
      %p127 = scmp.ne.s32.totalorder %s119, %s122
      %p128 = scmp.eq.s32.totalorder %s18, 0
      %p129 = por %p127, %p128
      %p130 = scmp.ne.s32.totalorder %s119, %s122
      %p131 = scmp.eq.s32.totalorder %s23, 1
      %p132 = por %p130, %p131
      %p133 = scmp.ne.s32.totalorder %s122, %s123
      %p134 = scmp.eq.s32.totalorder %s23, 0
      %p135 = por %p133, %p134
      %p136 = scmp.ne.s32.totalorder %s122, %s123
      %p137 = scmp.eq.s32.totalorder %s24, 1
      %p138 = por %p136, %p137
      %p140 = scmp.ne.s32.totalorder %s123, %s139
      %p141 = scmp.eq.s32.totalorder %s24, 0
      %p142 = por %p140, %p141
      %p143 = scmp.le.s32.totalorder 1, %s18
      %p144 = scmp.lt.s32.totalorder %s18, 3
      %p145 = pnand %p143, %p144
      %p146 = pneg %p145
      // Predicated region
      $region9: #{tpu_custom_call.1} parent=5 // pred_check
        _
      $region10: #{tpu_custom_call.1} parent=5 // pred_check_branch
        %148 = sbr.rel (%p145) target = $region12
      $region11: #{tpu_custom_call.1} parent=5 // pred_region
        %s149 = ssub.s32 %s18, 1
        // Predicated region
        $region13: #{tpu_custom_call.1} parent=11 // pred_check
          %p150 = pneg %p107
        $region14: #{tpu_custom_call.1} parent=11 // pred_check_branch
          %152 = sbr.rel (%p150) target = $region16
        $region15: #{tpu_custom_call.1} parent=11 // pred_region
          _
        $region16: #{tpu_custom_call.1} parent=11 // pred_fallthru
          _
      $region12: #{tpu_custom_call.1} parent=5 // pred_fallthru
        _
      %p153 = scmp.lt.s32.totalorder %s18, 2
      // Predicated region
      $region17: #{tpu_custom_call.1} parent=5 // pred_check
        %p154 = pneg %p153
      $region18: #{tpu_custom_call.1} parent=5 // pred_check_branch
        %156 = sbr.rel (%p154) target = $region20
      $region19: #{tpu_custom_call.1} parent=5 // pred_region
        // Predicated region
        $region21: #{tpu_custom_call.1} parent=19 // pred_check
          %p157 = pneg %p52
        $region22: #{tpu_custom_call.1} parent=19 // pred_check_branch
          %159 = sbr.rel (%p157) target = $region24
        $region23: #{tpu_custom_call.1} parent=19 // pred_region
          %s160 = sand.u32 %s42, 1
          %s161 = scalar_lea.sflag [#allocation3], %s160
          %s162 = sand.u32 %s42, 1
          %s163 = smul.addr %s162, 64
          %s164 = scalar_lea.vmem [#allocation2], %s163
          %s165 = smul.u32 8, %s26
          %167 = vsyncadd %s161, 0
          %s168 = smul.addr %s25, 8
          %s169 = sadd.s32 %s165, %s168
          %s170 = smul.addr %s169, 8
          %s171 = scalar_lea.hbm %s0, %s170
          %s173 = sshll.u32 %s171, 4
          %s174 = int_to_ptr.hbm [resolvable:$true] %s173
          %s175 = sshll.u32 %s164, 4
          %s176 = int_to_ptr.vmem [resolvable:$true] %s175
          %178 = dma.hbm_to_vmem [thread:$0]  %s174, 1024, %s176, %s161
        $region24: #{tpu_custom_call.1} parent=19 // pred_fallthru
          _
        // Predicated region
        $region25: #{tpu_custom_call.1} parent=19 // pred_check
          %p179 = pneg %p80
        $region26: #{tpu_custom_call.1} parent=19 // pred_check_branch
          %181 = sbr.rel (%p179) target = $region28
        $region27: #{tpu_custom_call.1} parent=19 // pred_region
          %s182 = sand.u32 %s70, 1
          %s183 = scalar_lea.sflag [#allocation6], %s182
          %s184 = sand.u32 %s70, 1
          %s185 = smul.addr %s184, 64
          %s186 = scalar_lea.vmem [#allocation5], %s185
          %s187 = smul.u32 8, %s26
          %189 = vsyncadd %s183, 0
          %s190 = smul.addr %s25, 8
          %s191 = sadd.s32 %s187, %s190
          %s192 = smul.addr %s191, 8
          %s193 = scalar_lea.hbm %s1, %s192
          %s195 = sshll.u32 %s193, 4
          %s196 = int_to_ptr.hbm [resolvable:$true] %s195
          %s197 = sshll.u32 %s186, 4
          %s198 = int_to_ptr.vmem [resolvable:$true] %s197
          %200 = dma.hbm_to_vmem [thread:$0]  %s196, 1024, %s198, %s183
        $region28: #{tpu_custom_call.1} parent=19 // pred_fallthru
          _
      $region20: #{tpu_custom_call.1} parent=5 // pred_fallthru
        _
      %p201 = scmp.le.s32.totalorder 1, %s18
      %p202 = scmp.lt.s32.totalorder %s18, 3
      %p203 = pnand %p201, %p202
      %p204 = pneg %p203
      // Predicated region
      $region29: #{tpu_custom_call.1} parent=5 // pred_check
        _
      $region30: #{tpu_custom_call.1} parent=5 // pred_check_branch
        %206 = sbr.rel (%p203) target = $region32
      $region31: #{tpu_custom_call.1} parent=5 // pred_region
        %s207 = ssub.s32 %s18, 1
        %s208 = sand.u32 %s45, 1
        %s209 = scalar_lea.sflag [#allocation3], %s208
        %s210 = sand.u32 %s45, 1
        %s211 = smul.addr %s210, 64
        %s212 = scalar_lea.vmem [#allocation2], %s211
        // Predicated region
        $region33: #{tpu_custom_call.1} parent=31 // pred_check
          %p213 = pneg %p58
        $region34: #{tpu_custom_call.1} parent=31 // pred_check_branch
          %215 = sbr.rel (%p213) target = $region36
        $region35: #{tpu_custom_call.1} parent=31 // pred_region
          %217 = dma.done %s209, 1024
        $region36: #{tpu_custom_call.1} parent=31 // pred_fallthru
          _
        %s218 = sand.u32 %s73, 1
        %s219 = scalar_lea.sflag [#allocation6], %s218
        %s220 = sand.u32 %s73, 1
        %s221 = smul.addr %s220, 64
        %s222 = scalar_lea.vmem [#allocation5], %s221
        // Predicated region
        $region37: #{tpu_custom_call.1} parent=31 // pred_check
          %p223 = pneg %p86
        $region38: #{tpu_custom_call.1} parent=31 // pred_check_branch
          %225 = sbr.rel (%p223) target = $region40
        $region39: #{tpu_custom_call.1} parent=31 // pred_region
          %227 = dma.done %s219, 1024
        $region40: #{tpu_custom_call.1} parent=31 // pred_fallthru
          _
        %s228 = sand.u32 %s45, 1
        %s229 = scalar_lea.sflag [#allocation3], %s228
        %s230 = sand.u32 %s45, 1
        %s231 = smul.addr %s230, 64
        %s232 = scalar_lea.vmem [#allocation2], %s231
        %p233 = pneg %p58
        %p234 = pneg %p55
        %s235 = sand.u32 %s73, 1
        %s236 = scalar_lea.sflag [#allocation6], %s235
        %s237 = sand.u32 %s73, 1
        %s238 = smul.addr %s237, 64
        %s239 = scalar_lea.vmem [#allocation5], %s238
        %p240 = pneg %p86
        %p241 = pneg %p83
        %p242 = pneg %p107
        %p243 = pneg %p104
        %p244 = pneg %p135
        %p245 = pneg %p132
        %s246 = sand.u32 %s122, 1
        %s247 = scalar_lea.sflag [#allocation4], %s246
        %s248 = sand.u32 %s122, 1
        %s249 = smul.addr %s248, 512
        %s250 = scalar_lea.vmem [#allocation7], %s249
        %s251 = smul.u32 8, %s28
        %s252 = smul.u32 8, %s28
        %s253 = smul.u32 8, %s28
        %v254 = vld [vmem:[%s212] sm:$0xff]
        %v255 = vld [vmem:[%s212 + $0x8] sm:$0xff]
        %v256 = vld [vmem:[%s212 + $0x10] sm:$0xff]
        %v257 = vld [vmem:[%s212 + $0x18] sm:$0xff]
        %v258 = vld [vmem:[%s212 + $0x20] sm:$0xff]
        %v259 = vld [vmem:[%s212 + $0x28] sm:$0xff]
        %v260 = vld [vmem:[%s212 + $0x30] sm:$0xff]
        %v261 = vld [vmem:[%s212 + $0x38] sm:$0xff]
        %v262 = vld [vmem:[%s222] sm:$0xff]
        %v263 = vld [vmem:[%s222 + $0x8] sm:$0xff]
        %v264 = vld [vmem:[%s222 + $0x10] sm:$0xff]
        %v265 = vld [vmem:[%s222 + $0x18] sm:$0xff]
        %v266 = vld [vmem:[%s222 + $0x20] sm:$0xff]
        %v267 = vld [vmem:[%s222 + $0x28] sm:$0xff]
        %v268 = vld [vmem:[%s222 + $0x30] sm:$0xff]
        %v269 = vld [vmem:[%s222 + $0x38] sm:$0xff]
        %v270 = vld [vmem:[%s2] sm:$0xff]
        %v271 = vld [vmem:[%s2 + $0x8] sm:$0xff]
        %v272 = vld [vmem:[%s2 + $0x10] sm:$0xff]
        %v273 = vld [vmem:[%s2 + $0x18] sm:$0xff]
        %v274 = vld [vmem:[%s2 + $0x20] sm:$0xff]
        %v275 = vld [vmem:[%s2 + $0x28] sm:$0xff]
        %v276 = vld [vmem:[%s2 + $0x30] sm:$0xff]
        %v277 = vld [vmem:[%s2 + $0x38] sm:$0xff]
        %vm278 = vcmask 130048
        %v280 = vsel %vm278, %v270, 0
        %v283 = vsel %vm278, %v271, 0
        %v286 = vsel %vm278, %v272, 0
        %v289 = vsel %vm278, %v273, 0
        %v292 = vsel %vm278, %v274, 0
        %v295 = vsel %vm278, %v275, 0
        %v298 = vsel %vm278, %v276, 0
        %v301 = vsel %vm278, %v277, 0
        %303 = vmatpush.msra.mxu0 0.0
        %304 = vmatpush.msra.mxu0 0.0
        %305 = vmatpush.msra.mxu0 0.0
        %306 = vmatpush.msra.mxu0 0.0
        %307 = vmatpush.msra.mxu0 0.0
        %308 = vmatpush.msra.mxu0 0.0
        %309 = vmatpush.msra.mxu0 0.0
        %310 = vmatpush.msra.mxu0 0.0
        %311 = vmatpush.msra.mxu0 0.0
        %312 = vmatpush.msra.mxu0 0.0
        %313 = vmatpush.msra.mxu0 0.0
        %314 = vmatpush.msra.mxu0 0.0
        %315 = vmatpush.msra.mxu0 0.0
        %316 = vmatpush.msra.mxu0 0.0
        %317 = vmatpush.msra.mxu0 %v262
        %318 = vmatpush.msra.mxu0 %v254
        %319 = vmatmul.f32.gmra.mxu0 %v280
        %v320 = vpop.f32.mrf.mxu0
        %v321 = vadd.f32 0.0, %v320
        %322 = vmatmul.f32.gmra.mxu0 %v283
        %v323 = vpop.f32.mrf.mxu0
        %v324 = vadd.f32 0.0, %v323
        %325 = vmatmul.f32.gmra.mxu0 %v286
        %v326 = vpop.f32.mrf.mxu0
        %v327 = vadd.f32 0.0, %v326
        %328 = vmatmul.f32.gmra.mxu0 %v289
        %v329 = vpop.f32.mrf.mxu0
        %v330 = vadd.f32 0.0, %v329
        %331 = vmatmul.f32.gmra.mxu0 %v292
        %v332 = vpop.f32.mrf.mxu0
        %v333 = vadd.f32 0.0, %v332
        %334 = vmatmul.f32.gmra.mxu0 %v295
        %v335 = vpop.f32.mrf.mxu0
        %v336 = vadd.f32 0.0, %v335
        %337 = vmatmul.f32.gmra.mxu0 %v298
        %v338 = vpop.f32.mrf.mxu0
        %v339 = vadd.f32 0.0, %v338
        %340 = vmatmul.f32.gmra.mxu0 %v301
        %v341 = vpop.f32.mrf.mxu0
        %v342 = vadd.f32 0.0, %v341
        %343 = vdwg.mxu0
        %344 = vmatpush.msra.mxu0 0.0
        %345 = vmatpush.msra.mxu0 0.0
        %346 = vmatpush.msra.mxu0 0.0
        %347 = vmatpush.msra.mxu0 0.0
        %348 = vmatpush.msra.mxu0 0.0
        %349 = vmatpush.msra.mxu0 0.0
        %350 = vmatpush.msra.mxu0 0.0
        %351 = vmatpush.msra.mxu0 0.0
        %352 = vmatpush.msra.mxu0 0.0
        %353 = vmatpush.msra.mxu0 0.0
        %354 = vmatpush.msra.mxu0 0.0
        %355 = vmatpush.msra.mxu0 0.0
        %356 = vmatpush.msra.mxu0 0.0
        %357 = vmatpush.msra.mxu0 0.0
        %358 = vmatpush.msra.mxu0 %v263
        %359 = vmatpush.msra.mxu0 %v255
        %360 = vmatmul.f32.gmra.mxu0 %v280
        %v361 = vpop.f32.mrf.mxu0
        %v362 = vadd.f32 0.0, %v361
        %363 = vmatmul.f32.gmra.mxu0 %v283
        %v364 = vpop.f32.mrf.mxu0
        %v365 = vadd.f32 0.0, %v364
        %366 = vmatmul.f32.gmra.mxu0 %v286
        %v367 = vpop.f32.mrf.mxu0
        %v368 = vadd.f32 0.0, %v367
        %369 = vmatmul.f32.gmra.mxu0 %v289
        %v370 = vpop.f32.mrf.mxu0
        %v371 = vadd.f32 0.0, %v370
        %372 = vmatmul.f32.gmra.mxu0 %v292
        %v373 = vpop.f32.mrf.mxu0
        %v374 = vadd.f32 0.0, %v373
        %375 = vmatmul.f32.gmra.mxu0 %v295
        %v376 = vpop.f32.mrf.mxu0
        %v377 = vadd.f32 0.0, %v376
        %378 = vmatmul.f32.gmra.mxu0 %v298
        %v379 = vpop.f32.mrf.mxu0
        %v380 = vadd.f32 0.0, %v379
        %381 = vmatmul.f32.gmra.mxu0 %v301
        %v382 = vpop.f32.mrf.mxu0
        %v383 = vadd.f32 0.0, %v382
        %384 = vdwg.mxu0
        %385 = vmatpush.msra.mxu0 0.0
        %386 = vmatpush.msra.mxu0 0.0
        %387 = vmatpush.msra.mxu0 0.0
        %388 = vmatpush.msra.mxu0 0.0
        %389 = vmatpush.msra.mxu0 0.0
        %390 = vmatpush.msra.mxu0 0.0
        %391 = vmatpush.msra.mxu0 0.0
        %392 = vmatpush.msra.mxu0 0.0
        %393 = vmatpush.msra.mxu0 0.0
        %394 = vmatpush.msra.mxu0 0.0
        %395 = vmatpush.msra.mxu0 0.0
        %396 = vmatpush.msra.mxu0 0.0
        %397 = vmatpush.msra.mxu0 0.0
        %398 = vmatpush.msra.mxu0 0.0
        %399 = vmatpush.msra.mxu0 %v264
        %400 = vmatpush.msra.mxu0 %v256
        %401 = vmatmul.f32.gmra.mxu0 %v280
        %v402 = vpop.f32.mrf.mxu0
        %v403 = vadd.f32 0.0, %v402
        %404 = vmatmul.f32.gmra.mxu0 %v283
        %v405 = vpop.f32.mrf.mxu0
        %v406 = vadd.f32 0.0, %v405
        %407 = vmatmul.f32.gmra.mxu0 %v286
        %v408 = vpop.f32.mrf.mxu0
        %v409 = vadd.f32 0.0, %v408
        %410 = vmatmul.f32.gmra.mxu0 %v289
        %v411 = vpop.f32.mrf.mxu0
        %v412 = vadd.f32 0.0, %v411
        %413 = vmatmul.f32.gmra.mxu0 %v292
        %v414 = vpop.f32.mrf.mxu0
        %v415 = vadd.f32 0.0, %v414
        %416 = vmatmul.f32.gmra.mxu0 %v295
        %v417 = vpop.f32.mrf.mxu0
        %v418 = vadd.f32 0.0, %v417
        %419 = vmatmul.f32.gmra.mxu0 %v298
        %v420 = vpop.f32.mrf.mxu0
        %v421 = vadd.f32 0.0, %v420
        %422 = vmatmul.f32.gmra.mxu0 %v301
        %v423 = vpop.f32.mrf.mxu0
        %v424 = vadd.f32 0.0, %v423
        %425 = vdwg.mxu0
        %426 = vmatpush.msra.mxu0 0.0
        %427 = vmatpush.msra.mxu0 0.0
        %428 = vmatpush.msra.mxu0 0.0
        %429 = vmatpush.msra.mxu0 0.0
        %430 = vmatpush.msra.mxu0 0.0
        %431 = vmatpush.msra.mxu0 0.0
        %432 = vmatpush.msra.mxu0 0.0
        %433 = vmatpush.msra.mxu0 0.0
        %434 = vmatpush.msra.mxu0 0.0
        %435 = vmatpush.msra.mxu0 0.0
        %436 = vmatpush.msra.mxu0 0.0
        %437 = vmatpush.msra.mxu0 0.0
        %438 = vmatpush.msra.mxu0 0.0
        %439 = vmatpush.msra.mxu0 0.0
        %440 = vmatpush.msra.mxu0 %v265
        %441 = vmatpush.msra.mxu0 %v257
        %442 = vmatmul.f32.gmra.mxu0 %v280
        %v443 = vpop.f32.mrf.mxu0
        %v444 = vadd.f32 0.0, %v443
        %445 = vmatmul.f32.gmra.mxu0 %v283
        %v446 = vpop.f32.mrf.mxu0
        %v447 = vadd.f32 0.0, %v446
        %448 = vmatmul.f32.gmra.mxu0 %v286
        %v449 = vpop.f32.mrf.mxu0
        %v450 = vadd.f32 0.0, %v449
        %451 = vmatmul.f32.gmra.mxu0 %v289
        %v452 = vpop.f32.mrf.mxu0
        %v453 = vadd.f32 0.0, %v452
        %454 = vmatmul.f32.gmra.mxu0 %v292
        %v455 = vpop.f32.mrf.mxu0
        %v456 = vadd.f32 0.0, %v455
        %457 = vmatmul.f32.gmra.mxu0 %v295
        %v458 = vpop.f32.mrf.mxu0
        %v459 = vadd.f32 0.0, %v458
        %460 = vmatmul.f32.gmra.mxu0 %v298
        %v461 = vpop.f32.mrf.mxu0
        %v462 = vadd.f32 0.0, %v461
        %463 = vmatmul.f32.gmra.mxu0 %v301
        %v464 = vpop.f32.mrf.mxu0
        %v465 = vadd.f32 0.0, %v464
        %466 = vdwg.mxu0
        %467 = vmatpush.msra.mxu0 0.0
        %468 = vmatpush.msra.mxu0 0.0
        %469 = vmatpush.msra.mxu0 0.0
        %470 = vmatpush.msra.mxu0 0.0
        %471 = vmatpush.msra.mxu0 0.0
        %472 = vmatpush.msra.mxu0 0.0
        %473 = vmatpush.msra.mxu0 0.0
        %474 = vmatpush.msra.mxu0 0.0
        %475 = vmatpush.msra.mxu0 0.0
        %476 = vmatpush.msra.mxu0 0.0
        %477 = vmatpush.msra.mxu0 0.0
        %478 = vmatpush.msra.mxu0 0.0
        %479 = vmatpush.msra.mxu0 0.0
        %480 = vmatpush.msra.mxu0 0.0
        %481 = vmatpush.msra.mxu0 %v266
        %482 = vmatpush.msra.mxu0 %v258
        %483 = vmatmul.f32.gmra.mxu0 %v280
        %v484 = vpop.f32.mrf.mxu0
        %v485 = vadd.f32 0.0, %v484
        %486 = vmatmul.f32.gmra.mxu0 %v283
        %v487 = vpop.f32.mrf.mxu0
        %v488 = vadd.f32 0.0, %v487
        %489 = vmatmul.f32.gmra.mxu0 %v286
        %v490 = vpop.f32.mrf.mxu0
        %v491 = vadd.f32 0.0, %v490
        %492 = vmatmul.f32.gmra.mxu0 %v289
        %v493 = vpop.f32.mrf.mxu0
        %v494 = vadd.f32 0.0, %v493
        %495 = vmatmul.f32.gmra.mxu0 %v292
        %v496 = vpop.f32.mrf.mxu0
        %v497 = vadd.f32 0.0, %v496
        %498 = vmatmul.f32.gmra.mxu0 %v295
        %v499 = vpop.f32.mrf.mxu0
        %v500 = vadd.f32 0.0, %v499
        %501 = vmatmul.f32.gmra.mxu0 %v298
        %v502 = vpop.f32.mrf.mxu0
        %v503 = vadd.f32 0.0, %v502
        %504 = vmatmul.f32.gmra.mxu0 %v301
        %v505 = vpop.f32.mrf.mxu0
        %v506 = vadd.f32 0.0, %v505
        %507 = vdwg.mxu0
        %508 = vmatpush.msra.mxu0 0.0
        %509 = vmatpush.msra.mxu0 0.0
        %510 = vmatpush.msra.mxu0 0.0
        %511 = vmatpush.msra.mxu0 0.0
        %512 = vmatpush.msra.mxu0 0.0
        %513 = vmatpush.msra.mxu0 0.0
        %514 = vmatpush.msra.mxu0 0.0
        %515 = vmatpush.msra.mxu0 0.0
        %516 = vmatpush.msra.mxu0 0.0
        %517 = vmatpush.msra.mxu0 0.0
        %518 = vmatpush.msra.mxu0 0.0
        %519 = vmatpush.msra.mxu0 0.0
        %520 = vmatpush.msra.mxu0 0.0
        %521 = vmatpush.msra.mxu0 0.0
        %522 = vmatpush.msra.mxu0 %v267
        %523 = vmatpush.msra.mxu0 %v259
        %524 = vmatmul.f32.gmra.mxu0 %v280
        %v525 = vpop.f32.mrf.mxu0
        %v526 = vadd.f32 0.0, %v525
        %527 = vmatmul.f32.gmra.mxu0 %v283
        %v528 = vpop.f32.mrf.mxu0
        %v529 = vadd.f32 0.0, %v528
        %530 = vmatmul.f32.gmra.mxu0 %v286
        %v531 = vpop.f32.mrf.mxu0
        %v532 = vadd.f32 0.0, %v531
        %533 = vmatmul.f32.gmra.mxu0 %v289
        %v534 = vpop.f32.mrf.mxu0
        %v535 = vadd.f32 0.0, %v534
        %536 = vmatmul.f32.gmra.mxu0 %v292
        %v537 = vpop.f32.mrf.mxu0
        %v538 = vadd.f32 0.0, %v537
        %539 = vmatmul.f32.gmra.mxu0 %v295
        %v540 = vpop.f32.mrf.mxu0
        %v541 = vadd.f32 0.0, %v540
        %542 = vmatmul.f32.gmra.mxu0 %v298
        %v543 = vpop.f32.mrf.mxu0
        %v544 = vadd.f32 0.0, %v543
        %545 = vmatmul.f32.gmra.mxu0 %v301
        %v546 = vpop.f32.mrf.mxu0
        %v547 = vadd.f32 0.0, %v546
        %548 = vdwg.mxu0
        %549 = vmatpush.msra.mxu0 0.0
        %550 = vmatpush.msra.mxu0 0.0
        %551 = vmatpush.msra.mxu0 0.0
        %552 = vmatpush.msra.mxu0 0.0
        %553 = vmatpush.msra.mxu0 0.0
        %554 = vmatpush.msra.mxu0 0.0
        %555 = vmatpush.msra.mxu0 0.0
        %556 = vmatpush.msra.mxu0 0.0
        %557 = vmatpush.msra.mxu0 0.0
        %558 = vmatpush.msra.mxu0 0.0
        %559 = vmatpush.msra.mxu0 0.0
        %560 = vmatpush.msra.mxu0 0.0
        %561 = vmatpush.msra.mxu0 0.0
        %562 = vmatpush.msra.mxu0 0.0
        %563 = vmatpush.msra.mxu0 %v268
        %564 = vmatpush.msra.mxu0 %v260
        %565 = vmatmul.f32.gmra.mxu0 %v280
        %v566 = vpop.f32.mrf.mxu0
        %v567 = vadd.f32 0.0, %v566
        %568 = vmatmul.f32.gmra.mxu0 %v283
        %v569 = vpop.f32.mrf.mxu0
        %v570 = vadd.f32 0.0, %v569
        %571 = vmatmul.f32.gmra.mxu0 %v286
        %v572 = vpop.f32.mrf.mxu0
        %v573 = vadd.f32 0.0, %v572
        %574 = vmatmul.f32.gmra.mxu0 %v289
        %v575 = vpop.f32.mrf.mxu0
        %v576 = vadd.f32 0.0, %v575
        %577 = vmatmul.f32.gmra.mxu0 %v292
        %v578 = vpop.f32.mrf.mxu0
        %v579 = vadd.f32 0.0, %v578
        %580 = vmatmul.f32.gmra.mxu0 %v295
        %v581 = vpop.f32.mrf.mxu0
        %v582 = vadd.f32 0.0, %v581
        %583 = vmatmul.f32.gmra.mxu0 %v298
        %v584 = vpop.f32.mrf.mxu0
        %v585 = vadd.f32 0.0, %v584
        %586 = vmatmul.f32.gmra.mxu0 %v301
        %v587 = vpop.f32.mrf.mxu0
        %v588 = vadd.f32 0.0, %v587
        %589 = vdwg.mxu0
        %590 = vmatpush.msra.mxu0 0.0
        %591 = vmatpush.msra.mxu0 0.0
        %592 = vmatpush.msra.mxu0 0.0
        %593 = vmatpush.msra.mxu0 0.0
        %594 = vmatpush.msra.mxu0 0.0
        %595 = vmatpush.msra.mxu0 0.0
        %596 = vmatpush.msra.mxu0 0.0
        %597 = vmatpush.msra.mxu0 0.0
        %598 = vmatpush.msra.mxu0 0.0
        %599 = vmatpush.msra.mxu0 0.0
        %600 = vmatpush.msra.mxu0 0.0
        %601 = vmatpush.msra.mxu0 0.0
        %602 = vmatpush.msra.mxu0 0.0
        %603 = vmatpush.msra.mxu0 0.0
        %604 = vmatpush.msra.mxu0 %v269
        %605 = vmatpush.msra.mxu0 %v261
        %606 = vmatmul.f32.gmra.mxu0 %v280
        %v607 = vpop.f32.mrf.mxu0
        %v608 = vadd.f32 0.0, %v607
        %609 = vmatmul.f32.gmra.mxu0 %v283
        %v610 = vpop.f32.mrf.mxu0
        %v611 = vadd.f32 0.0, %v610
        %612 = vmatmul.f32.gmra.mxu0 %v286
        %v613 = vpop.f32.mrf.mxu0
        %v614 = vadd.f32 0.0, %v613
        %615 = vmatmul.f32.gmra.mxu0 %v289
        %v616 = vpop.f32.mrf.mxu0
        %v617 = vadd.f32 0.0, %v616
        %618 = vmatmul.f32.gmra.mxu0 %v292
        %v619 = vpop.f32.mrf.mxu0
        %v620 = vadd.f32 0.0, %v619
        %621 = vmatmul.f32.gmra.mxu0 %v295
        %v622 = vpop.f32.mrf.mxu0
        %v623 = vadd.f32 0.0, %v622
        %624 = vmatmul.f32.gmra.mxu0 %v298
        %v625 = vpop.f32.mrf.mxu0
        %v626 = vadd.f32 0.0, %v625
        %627 = vmatmul.f32.gmra.mxu0 %v301
        %v628 = vpop.f32.mrf.mxu0
        %v629 = vadd.f32 0.0, %v628
        %630 = vdwg.mxu0
        %v631 = vmax.f32 %v321, 0.0
        %v632 = vmax.f32 %v362, 0.0
        %v633 = vmax.f32 %v403, 0.0
        %v634 = vmax.f32 %v444, 0.0
        %v635 = vmax.f32 %v485, 0.0
        %v636 = vmax.f32 %v526, 0.0
        %v637 = vmax.f32 %v567, 0.0
        %v638 = vmax.f32 %v608, 0.0
        %v639 = vmax.f32 %v324, 0.0
        %v640 = vmax.f32 %v365, 0.0
        %v641 = vmax.f32 %v406, 0.0
        %v642 = vmax.f32 %v447, 0.0
        %v643 = vmax.f32 %v488, 0.0
        %v644 = vmax.f32 %v529, 0.0
        %v645 = vmax.f32 %v570, 0.0
        %v646 = vmax.f32 %v611, 0.0
        %v647 = vmax.f32 %v327, 0.0
        %v648 = vmax.f32 %v368, 0.0
        %v649 = vmax.f32 %v409, 0.0
        %v650 = vmax.f32 %v450, 0.0
        %v651 = vmax.f32 %v491, 0.0
        %v652 = vmax.f32 %v532, 0.0
        %v653 = vmax.f32 %v573, 0.0
        %v654 = vmax.f32 %v614, 0.0
        %v655 = vmax.f32 %v330, 0.0
        %v656 = vmax.f32 %v371, 0.0
        %v657 = vmax.f32 %v412, 0.0
        %v658 = vmax.f32 %v453, 0.0
        %v659 = vmax.f32 %v494, 0.0
        %v660 = vmax.f32 %v535, 0.0
        %v661 = vmax.f32 %v576, 0.0
        %v662 = vmax.f32 %v617, 0.0
        %v663 = vmax.f32 %v333, 0.0
        %v664 = vmax.f32 %v374, 0.0
        %v665 = vmax.f32 %v415, 0.0
        %v666 = vmax.f32 %v456, 0.0
        %v667 = vmax.f32 %v497, 0.0
        %v668 = vmax.f32 %v538, 0.0
        %v669 = vmax.f32 %v579, 0.0
        %v670 = vmax.f32 %v620, 0.0
        %v671 = vmax.f32 %v336, 0.0
        %v672 = vmax.f32 %v377, 0.0
        %v673 = vmax.f32 %v418, 0.0
        %v674 = vmax.f32 %v459, 0.0
        %v675 = vmax.f32 %v500, 0.0
        %v676 = vmax.f32 %v541, 0.0
        %v677 = vmax.f32 %v582, 0.0
        %v678 = vmax.f32 %v623, 0.0
        %v679 = vmax.f32 %v339, 0.0
        %v680 = vmax.f32 %v380, 0.0
        %v681 = vmax.f32 %v421, 0.0
        %v682 = vmax.f32 %v462, 0.0
        %v683 = vmax.f32 %v503, 0.0
        %v684 = vmax.f32 %v544, 0.0
        %v685 = vmax.f32 %v585, 0.0
        %v686 = vmax.f32 %v626, 0.0
        %v687 = vmax.f32 %v342, 0.0
        %v688 = vmax.f32 %v383, 0.0
        %v689 = vmax.f32 %v424, 0.0
        %v690 = vmax.f32 %v465, 0.0
        %v691 = vmax.f32 %v506, 0.0
        %v692 = vmax.f32 %v547, 0.0
        %v693 = vmax.f32 %v588, 0.0
        %v694 = vmax.f32 %v629, 0.0
        %695 = vst [vmem:[%s250] sm:$0xff] %v631
        %696 = vst [vmem:[%s250 + $0x8] sm:$0xff] %v632
        %697 = vst [vmem:[%s250 + $0x10] sm:$0xff] %v633
        %698 = vst [vmem:[%s250 + $0x18] sm:$0xff] %v634
        %699 = vst [vmem:[%s250 + $0x20] sm:$0xff] %v635
        %700 = vst [vmem:[%s250 + $0x28] sm:$0xff] %v636
        %701 = vst [vmem:[%s250 + $0x30] sm:$0xff] %v637
        %702 = vst [vmem:[%s250 + $0x38] sm:$0xff] %v638
        %703 = vst [vmem:[%s250 + $0x40] sm:$0xff] %v639
        %704 = vst [vmem:[%s250 + $0x48] sm:$0xff] %v640
        %705 = vst [vmem:[%s250 + $0x50] sm:$0xff] %v641
        %706 = vst [vmem:[%s250 + $0x58] sm:$0xff] %v642
        %707 = vst [vmem:[%s250 + $0x60] sm:$0xff] %v643
        %708 = vst [vmem:[%s250 + $0x68] sm:$0xff] %v644
        %709 = vst [vmem:[%s250 + $0x70] sm:$0xff] %v645
        %710 = vst [vmem:[%s250 + $0x78] sm:$0xff] %v646
        %711 = vst [vmem:[%s250 + $0x80] sm:$0xff] %v647
        %712 = vst [vmem:[%s250 + $0x88] sm:$0xff] %v648
        %713 = vst [vmem:[%s250 + $0x90] sm:$0xff] %v649
        %714 = vst [vmem:[%s250 + $0x98] sm:$0xff] %v650
        %715 = vst [vmem:[%s250 + $0xa0] sm:$0xff] %v651
        %716 = vst [vmem:[%s250 + $0xa8] sm:$0xff] %v652
        %717 = vst [vmem:[%s250 + $0xb0] sm:$0xff] %v653
        %718 = vst [vmem:[%s250 + $0xb8] sm:$0xff] %v654
        %719 = vst [vmem:[%s250 + $0xc0] sm:$0xff] %v655
        %720 = vst [vmem:[%s250 + $0xc8] sm:$0xff] %v656
        %721 = vst [vmem:[%s250 + $0xd0] sm:$0xff] %v657
        %722 = vst [vmem:[%s250 + $0xd8] sm:$0xff] %v658
        %723 = vst [vmem:[%s250 + $0xe0] sm:$0xff] %v659
        %724 = vst [vmem:[%s250 + $0xe8] sm:$0xff] %v660
        %725 = vst [vmem:[%s250 + $0xf0] sm:$0xff] %v661
        %726 = vst [vmem:[%s250 + $0xf8] sm:$0xff] %v662
        %727 = vst [vmem:[%s250 + $0x100] sm:$0xff] %v663
        %728 = vst [vmem:[%s250 + $0x108] sm:$0xff] %v664
        %729 = vst [vmem:[%s250 + $0x110] sm:$0xff] %v665
        %730 = vst [vmem:[%s250 + $0x118] sm:$0xff] %v666
        %731 = vst [vmem:[%s250 + $0x120] sm:$0xff] %v667
        %732 = vst [vmem:[%s250 + $0x128] sm:$0xff] %v668
        %733 = vst [vmem:[%s250 + $0x130] sm:$0xff] %v669
        %734 = vst [vmem:[%s250 + $0x138] sm:$0xff] %v670
        %735 = vst [vmem:[%s250 + $0x140] sm:$0xff] %v671
        %736 = vst [vmem:[%s250 + $0x148] sm:$0xff] %v672
        %737 = vst [vmem:[%s250 + $0x150] sm:$0xff] %v673
        %738 = vst [vmem:[%s250 + $0x158] sm:$0xff] %v674
        %739 = vst [vmem:[%s250 + $0x160] sm:$0xff] %v675
        %740 = vst [vmem:[%s250 + $0x168] sm:$0xff] %v676
        %741 = vst [vmem:[%s250 + $0x170] sm:$0xff] %v677
        %742 = vst [vmem:[%s250 + $0x178] sm:$0xff] %v678
        %743 = vst [vmem:[%s250 + $0x180] sm:$0xff] %v679
        %744 = vst [vmem:[%s250 + $0x188] sm:$0xff] %v680
        %745 = vst [vmem:[%s250 + $0x190] sm:$0xff] %v681
        %746 = vst [vmem:[%s250 + $0x198] sm:$0xff] %v682
        %747 = vst [vmem:[%s250 + $0x1a0] sm:$0xff] %v683
        %748 = vst [vmem:[%s250 + $0x1a8] sm:$0xff] %v684
        %749 = vst [vmem:[%s250 + $0x1b0] sm:$0xff] %v685
        %750 = vst [vmem:[%s250 + $0x1b8] sm:$0xff] %v686
        %751 = vst [vmem:[%s250 + $0x1c0] sm:$0xff] %v687
        %752 = vst [vmem:[%s250 + $0x1c8] sm:$0xff] %v688
        %753 = vst [vmem:[%s250 + $0x1d0] sm:$0xff] %v689
        %754 = vst [vmem:[%s250 + $0x1d8] sm:$0xff] %v690
        %755 = vst [vmem:[%s250 + $0x1e0] sm:$0xff] %v691
        %756 = vst [vmem:[%s250 + $0x1e8] sm:$0xff] %v692
        %757 = vst [vmem:[%s250 + $0x1f0] sm:$0xff] %v693
        %758 = vst [vmem:[%s250 + $0x1f8] sm:$0xff] %v694
        %s759 = sand.u32 %s122, 1
        %s760 = scalar_lea.sflag [#allocation4], %s759
        %s761 = sand.u32 %s122, 1
        %s762 = smul.addr %s761, 512
        %s763 = scalar_lea.vmem [#allocation7], %s762
        // Predicated region
        $region41: #{tpu_custom_call.1} parent=31 // pred_check
          %p764 = pneg %p132
        $region42: #{tpu_custom_call.1} parent=31 // pred_check_branch
          %766 = sbr.rel (%p764) target = $region44
        $region43: #{tpu_custom_call.1} parent=31 // pred_region
          %s767 = smul.u32 8, %s28
          %769 = vsyncadd %s760, 0
          %s770 = smul.addr %s27, 64
          %s771 = sadd.s32 %s767, %s770
          %s772 = smul.addr %s771, 8
          %s773 = scalar_lea.hbm %s3, %s772
          %s774 = sshll.u32 %s763, 4
          %s775 = int_to_ptr.vmem [resolvable:$true] %s774
          %s776 = sshll.u32 %s773, 4
          %s777 = int_to_ptr.hbm [resolvable:$true] %s776
          %782 = dma.vmem_to_hbm [thread:$0]  %s775, 8192, %s777, %s760, 1024, 1024, 64
        $region44: #{tpu_custom_call.1} parent=31 // pred_fallthru
          _
      $region32: #{tpu_custom_call.1} parent=5 // pred_fallthru
        _
      %p783 = scmp.le.s32.totalorder 2, %s18
      // Predicated region
      $region45: #{tpu_custom_call.1} parent=5 // pred_check
        %p784 = pneg %p783
      $region46: #{tpu_custom_call.1} parent=5 // pred_check_branch
        %786 = sbr.rel (%p784) target = $region48
      $region47: #{tpu_custom_call.1} parent=5 // pred_region
        %s787 = ssub.s32 %s18, 2
        // Predicated region
        $region49: #{tpu_custom_call.1} parent=47 // pred_check
          %p788 = pneg %p138
        $region50: #{tpu_custom_call.1} parent=47 // pred_check_branch
          %790 = sbr.rel (%p788) target = $region52
        $region51: #{tpu_custom_call.1} parent=47 // pred_region
          %s791 = sand.u32 %s123, 1
          %s792 = scalar_lea.sflag [#allocation4], %s791
          %s793 = sand.u32 %s123, 1
          %s794 = smul.addr %s793, 512
          %s795 = scalar_lea.vmem [#allocation7], %s794
          %797 = dma.done %s792, 8192
        $region52: #{tpu_custom_call.1} parent=47 // pred_fallthru
          _
      $region48: #{tpu_custom_call.1} parent=5 // pred_fallthru
        _
    $region6: #{tpu_custom_call.1} parent=1 // loop_footer
      %s22 = sadd.s32 1, %s18
    $region7: #{tpu_custom_call.1} parent=1 // loop_footer_branch
      %17 = sbr.rel target = $region3
    $region8: #{tpu_custom_call.1} parent=1 // loop_exit
      _
    %798 = vsyncpa [#allocation3], 1
    %s799 = scalar_lea.sflag [#allocation3], 1
    %800 = vsyncpa %s799, 1
    %801 = vsyncpa [#allocation6], 1
    %s802 = scalar_lea.sflag [#allocation6], 1
    %803 = vsyncpa %s802, 1
    %804 = vsyncpa [#allocation4], 1
    %s805 = scalar_lea.sflag [#allocation4], 1
    %806 = vsyncpa %s805, 1

</llo_original>
